<compile_context>
chip_gen: v5e
topology: v5e:2x2
jax: 0.10.0
libtpu: 0.0.40
codegen_flags: <defaults>
</compile_context>

<pallas_src>
import math
from functools import partial

import numpy as np
import jax
import jax.numpy as jnp
from jax import lax
from jax.experimental import pallas as pl
from jax.experimental.pallas import tpu as pltpu


# ----------------------------------------------------------------------------
# Deterministic Klein-bottle filter bank (numpy, init-time only).
# Midpoint-quadrature approximation of the scipy.dblquad integral used by the
# reference klein_filter_generator.
# ----------------------------------------------------------------------------
def klein_filter_generator(in_channels, out_channels, kernel_size, quad_pts=32):
    size = 2 * kernel_size + 1
    filt = np.zeros((out_channels, in_channels, size, size), dtype=np.float64)
    d_size = int(math.floor(math.sqrt(out_channels)))
    for i in range(d_size):
        for k in range(d_size):
            t1 = math.pi * (i / d_size)
            t2 = math.pi * (k / d_size)
            for n in range(size):
                for m in range(size):
                    x0, x1 = -1 + 2 * n / size, -1 + 2 * (n + 1) / size
                    y0, y1 = -1 + 2 * m / size, -1 + 2 * (m + 1) / size
                    xs = x0 + (np.arange(quad_pts) + 0.5) * (x1 - x0) / quad_pts
                    ys = y0 + (np.arange(quad_pts) + 0.5) * (y1 - y0) / quad_pts
                    X, Y = np.meshgrid(xs, ys, indexing="ij")
                    U = math.cos(t1) * X + math.sin(t1) * Y
                    V = math.sin(t2) * U + math.cos(t2) * (2.0 * U * U - 1.0)
                    val = V.mean() * (x1 - x0) * (y1 - y0)
                    filt[i * d_size + k, :, n, m] = val
    return filt


# ----------------------------------------------------------------------------
# Lane-roll helper: forward circular shift along the last axis with jnp.roll
# semantics.  Uses the XLU lane-rotate (pltpu.roll); a one-time probe kernel
# confirms the rotate direction and falls back to jnp.roll if needed.
# ----------------------------------------------------------------------------
_LANE_ROLL_FN = None


def _make_lane_roll():
    try:
        def _probe(x_ref, o_ref):
            o_ref[...] = pltpu.roll(x_ref[...], 3, 1)

        xp = jnp.tile(jnp.arange(256, dtype=jnp.float32)[None, :], (8, 1))
        xp = xp.astype(jnp.bfloat16)
        got = pl.pallas_call(
            _probe, out_shape=jax.ShapeDtypeStruct((8, 256), jnp.bfloat16))(xp)
        got = jax.block_until_ready(got)
        if bool(jnp.array_equal(got, jnp.roll(xp, 3, axis=1))):
            return lambda x, s: pltpu.roll(x, s % x.shape[-1], x.ndim - 1)
        if bool(jnp.array_equal(got, jnp.roll(xp, -3, axis=1))):
            return lambda x, s: pltpu.roll(x, (-s) % x.shape[-1], x.ndim - 1)
    except Exception:
        pass
    return lambda x, s: jnp.roll(x, s, axis=-1)


def _get_lane_roll():
    global _LANE_ROLL_FN
    if _LANE_ROLL_FN is None:
        _LANE_ROLL_FN = _make_lane_roll()
    return _LANE_ROLL_FN


# ----------------------------------------------------------------------------
# Kernel A: per-sample 3x3 circular conv as ONE fused (OC,9C)x(9C,HW) matmul
#           (bf16 MXU operands, f32 accumulate) + bias + bias-centred BN
#           partial statistics.  Blocks NB samples per grid step.
#   x_ref:     (NB, C, HW)    bf16   spatial flattened row-major
#   w_ref:     (OC, 9*C)      bf16   fused per-tap weights (tap t = kh*3 + kw)
#   b_ref:     (OC, 1)        f32
#   y_ref:     (NB, OC, HW)   bf16   conv + bias (pre-BN), lane-dense
#   stats_ref: (NB, OC, 2)    f32    per-sample [sum, sum_sq] of conv (no bias)
#   xcat_ref:  (9*C, HW)      bf16   VMEM scratch: fused matmul operand
# ----------------------------------------------------------------------------
def conv_stats_kernel(x_ref, w_ref, b_ref, y_ref, stats_ref, xcat_ref,
                      *, H, W, roll_fn):
    HW = H * W
    NB = x_ref.shape[0]
    C = x_ref.shape[1]
    for n in range(NB):
        x = x_ref[n]                                        # (C, HW) bf16
        col = lax.broadcasted_iota(jnp.int32, x.shape, 1) % W
        # Circular W-shifts of the flattened row-major image: a flat lane roll
        # is correct everywhere except the row-wrap column, patched by a mask.
        # Everything stays bf16; rolls go to the (otherwise idle) XLU slot.
        x_wp = jnp.where(col == W - 1, roll_fn(x, W - 1), roll_fn(x, HW - 1))
        x_wm = jnp.where(col == 0, roll_fn(x, HW - (W - 1)), roll_fn(x, 1))
        bases = (x_wm, x, x_wp)                             # kw = 0, 1, 2

        # Build the fused (9C, HW) operand in VMEM scratch (tap t = kh*3+kw),
        # then contract once: 1 MXU stream instead of 9 tiny matmuls.
        for kh in range(3):
            sh = (-(kh - 1) * W) % HW                       # circular H shift
            for kw in range(3):
                t = kh * 3 + kw
                tap = bases[kw]
                if sh:
                    tap = roll_fn(tap, sh)
                xcat_ref[t * C:(t + 1) * C, :] = tap
        acc = jnp.dot(w_ref[...], xcat_ref[...],
                      preferred_element_type=jnp.float32)   # (OC, HW) f32

        # Bias-centred BN partials in f32 (bias re-added to the mean in the
        # wrapper) -- mitigates E[y^2]-E[y]^2 cancellation from large biases.
        s = jnp.sum(acc, axis=1, keepdims=True)             # (OC, 1)
        ss = jnp.sum(acc * acc, axis=1, keepdims=True)      # (OC, 1)
        stats_ref[n] = jnp.concatenate([s, ss], axis=1)     # (OC, 2)

        # bf16 intermediate halves the dominant HBM write/read of y.
        y_ref[n] = (acc + b_ref[...]).astype(jnp.bfloat16)


# ----------------------------------------------------------------------------
# Kernel B: fused BN-apply + LeakyReLU(0.1) + polyphase-invariant downsample.
# y is viewed as (OC*Hh, 2W): row = (channel, row-pair i); columns [0,W) hold
# image row 2i, columns [W,2W) hold image row 2i+1 (a free HBM reshape).
# The 4 component norms come from ONE y*y sublane reduction + lane-parity
# masks; only the selected component is compacted, with a single (2W, Wh)
# exact-0/1 selector matmul whose result rows are already the NCHW raster.
#   y_ref:     (NB, OC*Hh, 2W)  bf16
#   scale_ref: (OC*Hh, 1)       f32   gamma * rsqrt(var + eps), repeated per Hh
#   shift_ref: (OC*Hh, 1)       f32   beta - mean * scale, repeated per Hh
#   sel_ref:   (4, 2W, Wh)      f32   static 0/1 column/row-parity selectors
#   out_ref:   (NB, OC*Hh, Wh)  f32
# TODO(synk): the reference uses learned LPS logits (LPSLogitLayers) for the
#             component selection; that code is unavailable, so APS-style
#             max-norm selection is used instead.
# ----------------------------------------------------------------------------
def bn_lrelu_lps_kernel(y_ref, scale_ref, shift_ref, sel_ref, out_ref, *, W):
    NB = y_ref.shape[0]
    for n in range(NB):
        z = y_ref[n].astype(jnp.float32) * scale_ref[...] + shift_ref[...]
        z = jnp.maximum(z, 0.1 * z)                         # LeakyReLU(0.1)

        zz = jnp.sum(z * z, axis=0, keepdims=True)          # (1, 2W)
        colw = lax.broadcasted_iota(jnp.int32, zz.shape, 1)
        top = colw < W                                      # image-row parity 0
        even = (colw % 2) == 0                              # image-col parity 0
        zero = jnp.zeros_like(zz)
        n00 = jnp.sum(jnp.where(top & even, zz, zero))
        n01 = jnp.sum(jnp.where(top & ~even, zz, zero))
        n10 = jnp.sum(jnp.where(~top & even, zz, zero))
        n11 = jnp.sum(jnp.where(~top & ~even, zz, zero))

        # One-hot argmax, first max wins (component order 00, 01, 10, 11).
        w00 = jnp.where((n00 >= n01) & (n00 >= n10) & (n00 >= n11), 1.0, 0.0)
        w01 = jnp.where((n01 > n00) & (n01 >= n10) & (n01 >= n11), 1.0, 0.0)
        w10 = jnp.where((n10 > n00) & (n10 > n01) & (n10 >= n11), 1.0, 0.0)
        w11 = jnp.where((n11 > n00) & (n11 > n01) & (n11 > n10), 1.0, 0.0)
        sel = (w00 * sel_ref[0] + w01 * sel_ref[1]
               + w10 * sel_ref[2] + w11 * sel_ref[3])       # (2W, Wh) exact 0/1

        # Output rows are already the (OC, Hh) raster of the NCHW result; the
        # Wh-lane store is narrow but the per-sample output is tiny.
        out_ref[n] = jnp.dot(z, sel, preferred_element_type=jnp.float32)


# ----------------------------------------------------------------------------
# Wrapper helpers
# ----------------------------------------------------------------------------
def _polyphase_selectors(W):
    """(4, 2W, Wh) 0/1 selectors: Sel[2*ph+pw, r*W + w, j] = (r==ph)&(w==2j+pw)."""
    Wh = W // 2
    S = np.zeros((4, 2 * W, Wh), dtype=np.float32)
    for ph in range(2):
        for pw in range(2):
            k = 2 * ph + pw
            for j in range(Wh):
                S[k, ph * W + 2 * j + pw, j] = 1.0
    return jnp.asarray(S)


def _vmem_limit_bytes():
    cap = 64 * 1024 * 1024
    try:
        cap = int(pltpu.get_tpu_info().vmem_capacity_bytes)
    except Exception:
        pass
    # ~25% headroom for compiler-internal scratch; never below 16 MiB.
    return max(16 * 1024 * 1024, min((cap * 3) // 4, 100 * 1024 * 1024))


def _pick_nb(n, per_sample_bytes, budget):
    """Largest divisor NB of n with double-buffered blocks under budget and
    (for n >= 2) a grid length >= 2 so both v7x TensorCores receive work."""
    best = 1
    for nb in range(1, min(n, 8) + 1):
        if n % nb != 0:
            continue
        if n >= 2 and (n // nb) < 2:
            continue
        if 2 * nb * per_sample_bytes > budget:
            continue
        best = nb
    return best


def klein_filters_forward(x_nchw, weight, bias, gamma, beta, padding):
    """x_nchw: (N, C, H, W) f32.  Returns (N, OC, H//2, W//2) f32 (NCHW)."""
    N, C, H, W = x_nchw.shape
    OC, _, KH, KW = weight.shape
    assert KH == 3 and KW == 3 and padding == 1, "kernel assumes 3x3 conv, circular pad=1"
    assert H % 2 == 0 and W % 2 == 0
    HW = H * W
    Hh, Wh = H // 2, W // 2

    roll_fn = _get_lane_roll()
    vmem_limit = _vmem_limit_bytes()

    # bf16 HBM operands for the conv pass; BN statistics / normalization f32.
    x_flat = x_nchw.reshape(N, C, HW).astype(jnp.bfloat16)
    # Fused tap weights: w_cat[o, (kh*3+kw)*C + c] = weight[o, c, kh, kw].
    w_cat = weight.transpose(0, 2, 3, 1).reshape(OC, KH * KW * C).astype(jnp.bfloat16)
    b_col = bias.reshape(OC, 1).astype(jnp.float32)

    # --- Pass 1: fused conv + bias + per-sample BN partial stats -------------
    nb1 = _pick_nb(N, (C + OC) * HW * 2 * 3, vmem_limit // 4)
    cost_a = pl.CostEstimate(
        flops=2 * N * HW * C * KH * KW * OC,
        transcendentals=0,
        bytes_accessed=int(N * C * HW * 2 + w_cat.size * 2
                           + N * OC * HW * 2 + N * OC * 2 * 4),
    )
    y, stats = pl.pallas_call(
        partial(conv_stats_kernel, H=H, W=W, roll_fn=roll_fn),
        grid=(N // nb1,),
        in_specs=[
            pl.BlockSpec((nb1, C, HW), lambda n: (n, 0, 0)),
            pl.BlockSpec((OC, KH * KW * C), lambda n: (0, 0)),   # resident
            pl.BlockSpec((OC, 1), lambda n: (0, 0)),             # resident
        ],
        out_specs=[
            pl.BlockSpec((nb1, OC, HW), lambda n: (n, 0, 0)),
            pl.BlockSpec((nb1, OC, 2), lambda n: (n, 0, 0)),
        ],
        out_shape=[
            jax.ShapeDtypeStruct((N, OC, HW), jnp.bfloat16),
            jax.ShapeDtypeStruct((N, OC, 2), jnp.float32),
        ],
        scratch_shapes=[pltpu.VMEM((KH * KW * C, HW), jnp.bfloat16)],
        compiler_params=pltpu.CompilerParams(
            dimension_semantics=("parallel",), vmem_limit_bytes=vmem_limit),
        cost_estimate=cost_a,
    )(x_flat, w_cat, b_col)

    # --- Glue: fold global batch stats into per-channel scale/shift ----------
    tot = jnp.sum(stats, axis=0)                       # (OC, 2), f32
    cnt = float(N * HW)
    mean_c = tot[:, 0] / cnt                           # mean of conv (pre-bias)
    var = jnp.maximum(tot[:, 1] / cnt - mean_c * mean_c, 0.0)  # biased var
    mean = mean_c + bias.astype(jnp.float32)           # mean of y
    inv = jax.lax.rsqrt(var + 1e-5)
    scale = gamma.astype(jnp.float32) * inv
    shift = beta.astype(jnp.float32) - mean * scale
    scale_rep = jnp.repeat(scale, Hh).reshape(OC * Hh, 1)
    shift_rep = jnp.repeat(shift, Hh).reshape(OC * Hh, 1)

    sel4 = _polyphase_selectors(W)                     # (4, 2W, Wh)

    # Free contiguous reinterpretation of y: (N, OC, H*W) -> (N, OC*Hh, 2*W).
    y2 = y.reshape(N, OC * Hh, 2 * W)

    # --- Pass 2: fused BN-apply + LeakyReLU + polyphase selection ------------
    nb2 = _pick_nb(N, OC * Hh * (2 * W * 2 + Wh * 4) * 3, vmem_limit // 4)
    cost_b = pl.CostEstimate(
        flops=2 * N * (OC * Hh) * (2 * W) * Wh + 6 * N * OC * HW,
        transcendentals=0,
        bytes_accessed=int(N * OC * HW * 2 + sel4.size * 4
                           + N * OC * Hh * Wh * 4),
    )
    out2 = pl.pallas_call(
        partial(bn_lrelu_lps_kernel, W=W),
        grid=(N // nb2,),
        in_specs=[
            pl.BlockSpec((nb2, OC * Hh, 2 * W), lambda n: (n, 0, 0)),
            pl.BlockSpec((OC * Hh, 1), lambda n: (0, 0)),          # resident
            pl.BlockSpec((OC * Hh, 1), lambda n: (0, 0)),          # resident
            pl.BlockSpec((4, 2 * W, Wh), lambda n: (0, 0, 0)),     # resident
        ],
        out_specs=pl.BlockSpec((nb2, OC * Hh, Wh), lambda n: (n, 0, 0)),
        out_shape=jax.ShapeDtypeStruct((N, OC * Hh, Wh), jnp.float32),
        compiler_params=pltpu.CompilerParams(
            dimension_semantics=("parallel",), vmem_limit_bytes=vmem_limit),
        cost_estimate=cost_b,
    )(y2, scale_rep, shift_rep, sel4)

    # Rows are already (OC, Hh, Wh) raster-ordered -> NCHW via a free reshape.
    return out2.reshape(N, OC, Hh, Wh)


# ----------------------------------------------------------------------------
# Pure-JAX reference (same bf16 rounding of the conv operands and of the
# inter-pass activation) for validation.
# ----------------------------------------------------------------------------
def _reference_forward(x, weight, bias, gamma, beta):
    N, C, H, W = x.shape
    OC = weight.shape[0]
    xb = x.astype(jnp.bfloat16).astype(jnp.float32)
    wb = weight.astype(jnp.bfloat16).astype(jnp.float32)
    xp = jnp.pad(xb, ((0, 0), (0, 0), (1, 1), (1, 1)), mode="wrap")
    y = jnp.zeros((N, OC, H, W), jnp.float32)
    for kh in range(3):
        for kw in range(3):
            patch = xp[:, :, kh:kh + H, kw:kw + W]
            y = y + jnp.einsum("nchw,oc->nohw", patch, wb[:, :, kh, kw])
    y = y + bias.reshape(1, OC, 1, 1)
    mean = y.mean(axis=(0, 2, 3), keepdims=True)
    var = ((y - mean) ** 2).mean(axis=(0, 2, 3), keepdims=True)
    yb = y.astype(jnp.bfloat16).astype(jnp.float32)       # bf16 intermediate
    z = (yb - mean) * jax.lax.rsqrt(var + 1e-5)
    z = z * gamma.reshape(1, OC, 1, 1) + beta.reshape(1, OC, 1, 1)
    z = jnp.where(z >= 0.0, z, 0.1 * z)
    comps = jnp.stack(
        [z[:, :, ph::2, pw::2] for ph in range(2) for pw in range(2)], axis=1)
    norms = jnp.sum(comps * comps, axis=(2, 3, 4))        # (N, 4)
    idx = jnp.argmax(norms, axis=1)                       # first max wins
    return jnp.take_along_axis(
        comps, idx[:, None, None, None, None], axis=1)[:, 0]


if __name__ == "__main__":
    # Module config: in_channels=4, out_channels=4 (perfect square so every
    # Klein filter slot is filled), kernel_size=1 -> 3x3 conv, padding=1,
    # circular padding.
    in_channels, out_channels, kernel_size, padding = 4, 4, 1, 1
    N, H, W = 2, 16, 16

    weight = jnp.asarray(
        klein_filter_generator(in_channels, out_channels, kernel_size),
        dtype=jnp.float32)
    bias = 0.01 * jnp.arange(out_channels, dtype=jnp.float32)
    gamma = jnp.ones((out_channels,), dtype=jnp.float32)   # BatchNorm2d default
    beta = jnp.zeros((out_channels,), dtype=jnp.float32)   # BatchNorm2d default

    key = jax.random.PRNGKey(0)
    x = jax.random.normal(key, (N, in_channels, H, W), dtype=jnp.float32)

    out = klein_filters_forward(x, weight, bias, gamma, beta, padding)
    out = jax.block_until_ready(out)
    assert out.shape == (N, out_channels, H // 2, W // 2), out.shape
    assert bool(jnp.all(jnp.isfinite(out)))

    ref = _reference_forward(x, weight, bias, gamma, beta)
    np.testing.assert_allclose(np.asarray(out), np.asarray(ref),
                               rtol=2e-2, atol=2e-2)
    print("KERNEL_OK")
</pallas_src>

<mosaic_0001>
module attributes {stable_mosaic.version = 11 : i64} {
  func.func @_probe(%arg0: memref<8x256xbf16, #tpu.memory_space<vmem>>, %arg1: memref<8x256xbf16, #tpu.memory_space<vmem>>) attributes {dimension_semantics = [], scalar_prefetch = 0 : i64, scratch_operands = 0 : i64, tpu.core_type = #tpu.core_type<tc>} {
    %c0 = arith.constant 0 : index
    %c0_0 = arith.constant 0 : index
    %0 = vector.load %arg0[%c0, %c0_0] : memref<8x256xbf16, #tpu.memory_space<vmem>>, vector<8x256xbf16>
    %c3_i32 = arith.constant 3 : i32
    %1 = tpu.dynamic_rotate %0 by %c3_i32 dim 1 : vector<8x256xbf16>, i32 -> vector<8x256xbf16>
    %c0_1 = arith.constant 0 : index
    %c0_2 = arith.constant 0 : index
    %2 = vector.load %arg1[%c0_1, %c0_2] : memref<8x256xbf16, #tpu.memory_space<vmem>>, vector<8x256xbf16>
    tpu.vector_store %arg1[%c0_1, %c0_2], %1 {strides = array<i32>} : memref<8x256xbf16, #tpu.memory_space<vmem>>, vector<8x256xbf16>,
    return
  }
}

module attributes {stable_mosaic.version = 11 : i64} {
  func.func @conv_stats_kernel(%arg0: i32, %arg1: memref<1x4x256xbf16, #tpu.memory_space<vmem>>, %arg2: memref<4x36xbf16, #tpu.memory_space<vmem>>, %arg3: memref<4x1xf32, #tpu.memory_space<vmem>>, %arg4: memref<1x4x256xbf16, #tpu.memory_space<vmem>>, %arg5: memref<1x4x2xf32, #tpu.memory_space<vmem>>, %arg6: memref<36x256xbf16, #tpu.memory_space<vmem>>) attributes {dimension_semantics = [#tpu.dimension_semantics<parallel>], iteration_bounds = array<i64: 2>, scalar_prefetch = 0 : i64, scratch_operands = 1 : i64, tpu.core_type = #tpu.core_type<tc>, window_params = [{transform_indices = @transform_0, window_bounds = array<i64: 1, 4, 256>}, {pipeline_mode = #tpu.pipeline_mode<synchronous>, transform_indices = @transform_1, window_bounds = array<i64: 4, 36>}, {pipeline_mode = #tpu.pipeline_mode<synchronous>, transform_indices = @transform_2, window_bounds = array<i64: 4, 1>}, {transform_indices = @transform_3, window_bounds = array<i64: 1, 4, 256>}, {transform_indices = @transform_4, window_bounds = array<i64: 1, 4, 2>}]} {
    %c0 = arith.constant 0 : index
    %c0_0 = arith.constant 0 : index
    %c0_1 = arith.constant 0 : index
    %0 = vector.load %arg1[%c0, %c0_0, %c0_1] : memref<1x4x256xbf16, #tpu.memory_space<vmem>>, vector<1x4x256xbf16>
    %1 = vector.shape_cast %0 : vector<1x4x256xbf16> to vector<4x256xbf16>
    %2 = tpu.iota {dimensions = array<i32: 1>} : vector<4x256xi32>
    %c16_i32 = arith.constant 16 : i32
    %c0_i32 = arith.constant 0 : i32
    %3 = arith.cmpi eq, %c16_i32, %c0_i32 : i32
    %c1_i32 = arith.constant 1 : i32
    %4 = arith.select %3, %c1_i32, %c16_i32 : i32
    %5 = vector.broadcast %4 : i32 to vector<4x256xi32>
    %6 = arith.remsi %2, %5 : vector<4x256xi32>
    %c0_i32_2 = arith.constant 0 : i32
    %7 = vector.broadcast %c0_i32_2 : i32 to vector<4x256xi32>
    %8 = arith.cmpi ne, %6, %7 : vector<4x256xi32>
    %c0_i32_3 = arith.constant 0 : i32
    %9 = vector.broadcast %c0_i32_3 : i32 to vector<4x256xi32>
    %10 = arith.cmpi slt, %6, %9 : vector<4x256xi32>
    %c0_i32_4 = arith.constant 0 : i32
    %11 = arith.cmpi slt, %4, %c0_i32_4 : i32
    %12 = vector.broadcast %11 : i1 to vector<4x256xi1>
    %13 = vector.broadcast %12 : vector<4x256xi1> to vector<4x256xi1>
    %14 = arith.xori %10, %13 : vector<4x256xi1>
    %15 = arith.andi %14, %8 : vector<4x256xi1>
    %16 = vector.broadcast %4 : i32 to vector<4x256xi32>
    %17 = arith.addi %6, %16 : vector<4x256xi32>
    %18 = arith.select %15, %17, %6 : vector<4x256xi1>, vector<4x256xi32>
    %c15_i32 = arith.constant 15 : i32
    %19 = vector.broadcast %c15_i32 : i32 to vector<4x256xi32>
    %20 = arith.cmpi eq, %18, %19 : vector<4x256xi32>
    %21 = vector.extract_strided_slice %1 {offsets = [0, 241], sizes = [4, 15], strides = [1, 1]} : vector<4x256xbf16> to vector<4x15xbf16>
    %22 = vector.extract_strided_slice %1 {offsets = [0, 0], sizes = [4, 241], strides = [1, 1]} : vector<4x256xbf16> to vector<4x241xbf16>
    %23 = tpu.concatenate %21, %22 in 1 : vector<4x15xbf16>, vector<4x241xbf16> -> vector<4x256xbf16>
    %24 = vector.extract_strided_slice %1 {offsets = [0, 1], sizes = [4, 255], strides = [1, 1]} : vector<4x256xbf16> to vector<4x255xbf16>
    %25 = vector.extract_strided_slice %1 {offsets = [0, 0], sizes = [4, 1], strides = [1, 1]} : vector<4x256xbf16> to vector<4x1xbf16>
    %26 = tpu.concatenate %24, %25 in 1 : vector<4x255xbf16>, vector<4x1xbf16> -> vector<4x256xbf16>
    %27 = arith.select %20, %23, %26 : vector<4x256xi1>, vector<4x256xbf16>
    %c0_i32_5 = arith.constant 0 : i32
    %28 = vector.broadcast %c0_i32_5 : i32 to vector<4x256xi32>
    %29 = arith.cmpi eq, %18, %28 : vector<4x256xi32>
    %30 = vector.extract_strided_slice %1 {offsets = [0, 15], sizes = [4, 241], strides = [1, 1]} : vector<4x256xbf16> to vector<4x241xbf16>
    %31 = vector.extract_strided_slice %1 {offsets = [0, 0], sizes = [4, 15], strides = [1, 1]} : vector<4x256xbf16> to vector<4x15xbf16>
    %32 = tpu.concatenate %30, %31 in 1 : vector<4x241xbf16>, vector<4x15xbf16> -> vector<4x256xbf16>
    %33 = vector.extract_strided_slice %1 {offsets = [0, 255], sizes = [4, 1], strides = [1, 1]} : vector<4x256xbf16> to vector<4x1xbf16>
    %34 = vector.extract_strided_slice %1 {offsets = [0, 0], sizes = [4, 255], strides = [1, 1]} : vector<4x256xbf16> to vector<4x255xbf16>
    %35 = tpu.concatenate %33, %34 in 1 : vector<4x1xbf16>, vector<4x255xbf16> -> vector<4x256xbf16>
    %36 = arith.select %29, %32, %35 : vector<4x256xi1>, vector<4x256xbf16>
    %37 = vector.extract_strided_slice %36 {offsets = [0, 240], sizes = [4, 16], strides = [1, 1]} : vector<4x256xbf16> to vector<4x16xbf16>
    %38 = vector.extract_strided_slice %36 {offsets = [0, 0], sizes = [4, 240], strides = [1, 1]} : vector<4x256xbf16> to vector<4x240xbf16>
    %39 = tpu.concatenate %37, %38 in 1 : vector<4x16xbf16>, vector<4x240xbf16> -> vector<4x256xbf16>
    %c0_6 = arith.constant 0 : index
    %c0_7 = arith.constant 0 : index
    %40 = vector.load %arg6[%c0_6, %c0_7] : memref<36x256xbf16, #tpu.memory_space<vmem>>, vector<4x256xbf16>
    tpu.vector_store %arg6[%c0_6, %c0_7], %39 {strides = array<i32>} : memref<36x256xbf16, #tpu.memory_space<vmem>>, vector<4x256xbf16>,
    %41 = vector.extract_strided_slice %1 {offsets = [0, 240], sizes = [4, 16], strides = [1, 1]} : vector<4x256xbf16> to vector<4x16xbf16>
    %42 = vector.extract_strided_slice %1 {offsets = [0, 0], sizes = [4, 240], strides = [1, 1]} : vector<4x256xbf16> to vector<4x240xbf16>
    %43 = tpu.concatenate %41, %42 in 1 : vector<4x16xbf16>, vector<4x240xbf16> -> vector<4x256xbf16>
    %c4 = arith.constant 4 : index
    %c0_8 = arith.constant 0 : index
    %44 = vector.load %arg6[%c4, %c0_8] : memref<36x256xbf16, #tpu.memory_space<vmem>>, vector<4x256xbf16>
    tpu.vector_store %arg6[%c4, %c0_8], %43 {strides = array<i32>} : memref<36x256xbf16, #tpu.memory_space<vmem>>, vector<4x256xbf16>,
    %45 = vector.extract_strided_slice %27 {offsets = [0, 240], sizes = [4, 16], strides = [1, 1]} : vector<4x256xbf16> to vector<4x16xbf16>
    %46 = vector.extract_strided_slice %27 {offsets = [0, 0], sizes = [4, 240], strides = [1, 1]} : vector<4x256xbf16> to vector<4x240xbf16>
    %47 = tpu.concatenate %45, %46 in 1 : vector<4x16xbf16>, vector<4x240xbf16> -> vector<4x256xbf16>
    %c8 = arith.constant 8 : index
    %c0_9 = arith.constant 0 : index
    %48 = vector.load %arg6[%c8, %c0_9] : memref<36x256xbf16, #tpu.memory_space<vmem>>, vector<4x256xbf16>
    tpu.vector_store %arg6[%c8, %c0_9], %47 {strides = array<i32>} : memref<36x256xbf16, #tpu.memory_space<vmem>>, vector<4x256xbf16>,
    %c12 = arith.constant 12 : index
    %c0_10 = arith.constant 0 : index
    %49 = vector.load %arg6[%c12, %c0_10] : memref<36x256xbf16, #tpu.memory_space<vmem>>, vector<4x256xbf16>
    tpu.vector_store %arg6[%c12, %c0_10], %36 {strides = array<i32>} : memref<36x256xbf16, #tpu.memory_space<vmem>>, vector<4x256xbf16>,
    %c16 = arith.constant 16 : index
    %c0_11 = arith.constant 0 : index
    %50 = vector.load %arg6[%c16, %c0_11] : memref<36x256xbf16, #tpu.memory_space<vmem>>, vector<4x256xbf16>
    tpu.vector_store %arg6[%c16, %c0_11], %1 {strides = array<i32>} : memref<36x256xbf16, #tpu.memory_space<vmem>>, vector<4x256xbf16>,
    %c20 = arith.constant 20 : index
    %c0_12 = arith.constant 0 : index
    %51 = vector.load %arg6[%c20, %c0_12] : memref<36x256xbf16, #tpu.memory_space<vmem>>, vector<4x256xbf16>
    tpu.vector_store %arg6[%c20, %c0_12], %27 {strides = array<i32>} : memref<36x256xbf16, #tpu.memory_space<vmem>>, vector<4x256xbf16>,
    %52 = vector.extract_strided_slice %36 {offsets = [0, 16], sizes = [4, 240], strides = [1, 1]} : vector<4x256xbf16> to vector<4x240xbf16>
    %53 = vector.extract_strided_slice %36 {offsets = [0, 0], sizes = [4, 16], strides = [1, 1]} : vector<4x256xbf16> to vector<4x16xbf16>
    %54 = tpu.concatenate %52, %53 in 1 : vector<4x240xbf16>, vector<4x16xbf16> -> vector<4x256xbf16>
    %c24 = arith.constant 24 : index
    %c0_13 = arith.constant 0 : index
    %55 = vector.load %arg6[%c24, %c0_13] : memref<36x256xbf16, #tpu.memory_space<vmem>>, vector<4x256xbf16>
    tpu.vector_store %arg6[%c24, %c0_13], %54 {strides = array<i32>} : memref<36x256xbf16, #tpu.memory_space<vmem>>, vector<4x256xbf16>,
    %56 = vector.extract_strided_slice %1 {offsets = [0, 16], sizes = [4, 240], strides = [1, 1]} : vector<4x256xbf16> to vector<4x240xbf16>
    %57 = vector.extract_strided_slice %1 {offsets = [0, 0], sizes = [4, 16], strides = [1, 1]} : vector<4x256xbf16> to vector<4x16xbf16>
    %58 = tpu.concatenate %56, %57 in 1 : vector<4x240xbf16>, vector<4x16xbf16> -> vector<4x256xbf16>
    %c28 = arith.constant 28 : index
    %c0_14 = arith.constant 0 : index
    %59 = vector.load %arg6[%c28, %c0_14] : memref<36x256xbf16, #tpu.memory_space<vmem>>, vector<4x256xbf16>
    tpu.vector_store %arg6[%c28, %c0_14], %58 {strides = array<i32>} : memref<36x256xbf16, #tpu.memory_space<vmem>>, vector<4x256xbf16>,
    %60 = vector.extract_strided_slice %27 {offsets = [0, 16], sizes = [4, 240], strides = [1, 1]} : vector<4x256xbf16> to vector<4x240xbf16>
    %61 = vector.extract_strided_slice %27 {offsets = [0, 0], sizes = [4, 16], strides = [1, 1]} : vector<4x256xbf16> to vector<4x16xbf16>
    %62 = tpu.concatenate %60, %61 in 1 : vector<4x240xbf16>, vector<4x16xbf16> -> vector<4x256xbf16>
    %c32 = arith.constant 32 : index
    %c0_15 = arith.constant 0 : index
    %63 = vector.load %arg6[%c32, %c0_15] : memref<36x256xbf16, #tpu.memory_space<vmem>>, vector<4x256xbf16>
    tpu.vector_store %arg6[%c32, %c0_15], %62 {strides = array<i32>} : memref<36x256xbf16, #tpu.memory_space<vmem>>, vector<4x256xbf16>,
    %c0_16 = arith.constant 0 : index
    %c0_17 = arith.constant 0 : index
    %64 = vector.load %arg2[%c0_16, %c0_17] : memref<4x36xbf16, #tpu.memory_space<vmem>>, vector<4x36xbf16>
    %c0_18 = arith.constant 0 : index
    %c0_19 = arith.constant 0 : index
    %65 = vector.load %arg6[%c0_18, %c0_19] : memref<36x256xbf16, #tpu.memory_space<vmem>>, vector<36x256xbf16>
    %cst = arith.constant dense<0.000000e+00> : vector<4x256xf32>
    %66 = tpu.matmul %64, %65, %cst {dimension_numbers = #tpu.dot_dimension_numbers<[1], [0], [0], [1], [0, 0, 1, 1], [], []>} : vector<4x36xbf16>, vector<36x256xbf16>, vector<4x256xf32> -> vector<4x256xf32>
    %cst_20 = arith.constant dense<0.000000e+00> : vector<4xf32>
    %67 = vector.multi_reduction <add>, %66, %cst_20 [1] : vector<4x256xf32> to vector<4xf32>
    %68 = vector.shape_cast %67 : vector<4xf32> to vector<4x1xf32>
    %69 = arith.mulf %66, %66 : vector<4x256xf32>
    %cst_21 = arith.constant dense<0.000000e+00> : vector<4xf32>
    %70 = vector.multi_reduction <add>, %69, %cst_21 [1] : vector<4x256xf32> to vector<4xf32>
    %71 = vector.shape_cast %70 : vector<4xf32> to vector<4x1xf32>
    %72 = tpu.concatenate %68, %71 in 1 : vector<4x1xf32>, vector<4x1xf32> -> vector<4x2xf32>
    %c0_22 = arith.constant 0 : index
    %c0_23 = arith.constant 0 : index
    %c0_24 = arith.constant 0 : index
    %73 = vector.load %arg5[%c0_22, %c0_23, %c0_24] : memref<1x4x2xf32, #tpu.memory_space<vmem>>, vector<1x4x2xf32>
    %74 = vector.shape_cast %73 : vector<1x4x2xf32> to vector<4x2xf32>
    %75 = vector.shape_cast %72 : vector<4x2xf32> to vector<1x4x2xf32>
    tpu.vector_store %arg5[%c0_22, %c0_23, %c0_24], %75 {strides = array<i32>} : memref<1x4x2xf32, #tpu.memory_space<vmem>>, vector<1x4x2xf32>,
    %c0_25 = arith.constant 0 : index
    %c0_26 = arith.constant 0 : index
    %76 = vector.load %arg3[%c0_25, %c0_26] : memref<4x1xf32, #tpu.memory_space<vmem>>, vector<4x1xf32>
    %77 = vector.broadcast %76 : vector<4x1xf32> to vector<4x256xf32>
    %78 = arith.addf %66, %77 : vector<4x256xf32>
    %79 = arith.truncf %78 : vector<4x256xf32> to vector<4x256xbf16>
    %c0_27 = arith.constant 0 : index
    %c0_28 = arith.constant 0 : index
    %c0_29 = arith.constant 0 : index
    %80 = vector.load %arg4[%c0_27, %c0_28, %c0_29] : memref<1x4x256xbf16, #tpu.memory_space<vmem>>, vector<1x4x256xbf16>
    %81 = vector.shape_cast %80 : vector<1x4x256xbf16> to vector<4x256xbf16>
    %82 = vector.shape_cast %79 : vector<4x256xbf16> to vector<1x4x256xbf16>
    tpu.vector_store %arg4[%c0_27, %c0_28, %c0_29], %82 {strides = array<i32>} : memref<1x4x256xbf16, #tpu.memory_space<vmem>>, vector<1x4x256xbf16>,
    return
  }
  func.func @transform_0(%arg0: i32) -> (i32, i32, i32) {
    %c0_i32 = arith.constant 0 : i32
    %c0_i32_0 = arith.constant 0 : i32
    %c0_i32_1 = arith.constant 0 : i32
    return %arg0, %c0_i32, %c0_i32_0 : i32, i32, i32
  }
  func.func @transform_1(%arg0: i32) -> (i32, i32) {
    %c0_i32 = arith.constant 0 : i32
    %c0_i32_0 = arith.constant 0 : i32
    %c0_i32_1 = arith.constant 0 : i32
    return %c0_i32, %c0_i32_0 : i32, i32
  }
  func.func @transform_2(%arg0: i32) -> (i32, i32) {
    %c0_i32 = arith.constant 0 : i32
    %c0_i32_0 = arith.constant 0 : i32
    %c0_i32_1 = arith.constant 0 : i32
    return %c0_i32, %c0_i32_0 : i32, i32
  }
  func.func @transform_3(%arg0: i32) -> (i32, i32, i32) {
    %c0_i32 = arith.constant 0 : i32
    %c0_i32_0 = arith.constant 0 : i32
    %c0_i32_1 = arith.constant 0 : i32
    return %arg0, %c0_i32, %c0_i32_0 : i32, i32, i32
  }
  func.func @transform_4(%arg0: i32) -> (i32, i32, i32) {
    %c0_i32 = arith.constant 0 : i32
    %c0_i32_0 = arith.constant 0 : i32
    %c0_i32_1 = arith.constant 0 : i32
    return %arg0, %c0_i32, %c0_i32_0 : i32, i32, i32
  }
}

</mosaic_0001>

<llo_original>
// kernel: tpu_custom_call.1
$region0: #{tpu_custom_call.1}
  #allocation0 [shape = 'u32[]', space=smem, size = 0x4, offset = 0x4, fixed_abs, tag = 'smem constant byte address 0x4 - core index']
  #allocation1 [shape = 'u32[72,128]{1,0:T(1,128)}', space=vmem, size = 0x9000, scoped, tag = 'internal scratch']
  #allocation2 [shape = 'bf16[36,256]{1,0:T(8,128)(2,1)}', space=vmem, size = 0x5000, scoped, tag = 'scratch operand']
  %s0 = inlined_call_operand.hbm [shape: bf16[2,4,256], index: 0, kind: input, shape index: {}]
  %s1 = inlined_call_operand.vmem [shape: bf16[4,36], index: 1, kind: input, shape index: {}]
  %s2 = inlined_call_operand.vmem [shape: f32[4,1], index: 2, kind: input, shape index: {}]
  %s3 = inlined_call_operand.hbm [shape: bf16[2,4,256], index: 3, kind: output, shape index: {0}]
  %s4 = inlined_call_operand.vmem [shape: f32[2,4,2], index: 4, kind: output, shape index: {1}]
  %5 = xla_tuple %s3, %s4
  %s6 = sld [smem:[#allocation0]]
  $region57: #{tpu_custom_call.1} parent=0
    _
  %s8 = ssub.s32 1, %s6
  %s9 = scalar_select 0, %s8, %s6
  $region1: #{tpu_custom_call.1} parent=0
    #allocation3 [shape = 'u8[4096]{0}', space=vmem, size = 0x1000, scoped, tag = 'input window, operand 0']
    #allocation4 [shape = 's32[2]{0}', space=sflag, size = 0x8, scoped, tag = 'scoped memory for tpu_custom_call.1']
    #allocation5 [shape = 's32[2]{0}', space=sflag, size = 0x8, scoped, tag = 'scoped memory for tpu_custom_call.1']
    #allocation6 [shape = 'u8[4096]{0}', space=vmem, size = 0x1000, scoped, tag = 'output window, operand 0']
    %10 = vsyncpa [#allocation4], 0
    %s11 = scalar_lea.sflag [#allocation4], 1
    %12 = vsyncpa %s11, 0
    %13 = vsyncpa [#allocation5], 0
    %s14 = scalar_lea.sflag [#allocation5], 1
    %15 = vsyncpa %s14, 0
    loop: start=0, step=1, limit=4
    $region2: #{tpu_custom_call.1} parent=1 // loop_pre_header
      _
    $region3: #{tpu_custom_call.1} parent=1 // loop_header
      %s17 = sphi 0, %s21
      %p18 = scmp.ge.s32.totalorder %s17, 4
      %s27 = sphi 0, %s29
      %s30 = sphi 0, %s27
      %s31 = sphi 0, %s30
      %s47 = sphi 0, %s31
      %s51 = sphi 0, %s51
      %s53 = sphi 0, %s51
      %s54 = sphi 0, %s53
      %s68 = sphi 0, %s54
      %s72 = sphi 0, %s72
      %s74 = sphi 0, %s72
      %s75 = sphi 0, %s74
      %s89 = sphi 0, %s75
      %s95 = sphi 0, %s97
      %s98 = sphi 0, %s95
      %s99 = sphi 0, %s98
      %s115 = sphi 0, %s99
      %s121 = sphi 0, %s123
      %s124 = sphi 0, %s121
      %s125 = sphi 0, %s124
      %s141 = sphi 0, %s125
    $region4: #{tpu_custom_call.1} parent=1 // loop_header_branch
      %20 = sbr.rel (%p18) target = $region8
    $region5: #{tpu_custom_call.1} parent=1 // loop_body
      %s22 = ssub.s32 %s17, 1
      %s23 = ssub.s32 %s17, 2
      %s24 = sadd.s32 %s17, 1
      %s25 = ssub.s32 %s17, %s24
      %p26 = scmp.eq.s32.totalorder %s25, 0
      %s28 = sadd.s32 %s27, 1
      %s29 = scalar_select %p26, %s27, %s28
      %p32 = pneg %p26
      %p33 = scmp.eq.s32.totalorder %s17, 1
      %p34 = por %p32, %p33
      %p35 = scmp.ne.s32.totalorder %s27, %s30
      %p36 = scmp.eq.s32.totalorder %s17, 0
      %p37 = por %p35, %p36
      %p38 = scmp.ne.s32.totalorder %s27, %s30
      %p39 = scmp.eq.s32.totalorder %s22, 1
      %p40 = por %p38, %p39
      %p41 = scmp.ne.s32.totalorder %s30, %s31
      %p42 = scmp.eq.s32.totalorder %s22, 0
      %p43 = por %p41, %p42
      %p44 = scmp.ne.s32.totalorder %s30, %s31
      %p45 = scmp.eq.s32.totalorder %s23, 1
      %p46 = por %p44, %p45
      %p48 = scmp.ne.s32.totalorder %s31, %s47
      %p49 = scmp.eq.s32.totalorder %s23, 0
      %p50 = por %p48, %p49
      %s52 = sadd.s32 %s51, 1
      %p55 = scmp.eq.s32.totalorder %s17, 1
      %p56 = scmp.ne.s32.totalorder %s51, %s53
      %p57 = scmp.eq.s32.totalorder %s17, 0
      %p58 = por %p56, %p57
      %p59 = scmp.ne.s32.totalorder %s51, %s53
      %p60 = scmp.eq.s32.totalorder %s22, 1
      %p61 = por %p59, %p60
      %p62 = scmp.ne.s32.totalorder %s53, %s54
      %p63 = scmp.eq.s32.totalorder %s22, 0
      %p64 = por %p62, %p63
      %p65 = scmp.ne.s32.totalorder %s53, %s54
      %p66 = scmp.eq.s32.totalorder %s23, 1
      %p67 = por %p65, %p66
      %p69 = scmp.ne.s32.totalorder %s54, %s68
      %p70 = scmp.eq.s32.totalorder %s23, 0
      %p71 = por %p69, %p70
      %s73 = sadd.s32 %s72, 1
      %p76 = scmp.eq.s32.totalorder %s17, 1
      %p77 = scmp.ne.s32.totalorder %s72, %s74
      %p78 = scmp.eq.s32.totalorder %s17, 0
      %p79 = por %p77, %p78
      %p80 = scmp.ne.s32.totalorder %s72, %s74
      %p81 = scmp.eq.s32.totalorder %s22, 1
      %p82 = por %p80, %p81
      %p83 = scmp.ne.s32.totalorder %s74, %s75
      %p84 = scmp.eq.s32.totalorder %s22, 0
      %p85 = por %p83, %p84
      %p86 = scmp.ne.s32.totalorder %s74, %s75
      %p87 = scmp.eq.s32.totalorder %s23, 1
      %p88 = por %p86, %p87
      %p90 = scmp.ne.s32.totalorder %s75, %s89
      %p91 = scmp.eq.s32.totalorder %s23, 0
      %p92 = por %p90, %p91
      %s93 = ssub.s32 %s17, %s24
      %p94 = scmp.eq.s32.totalorder %s93, 0
      %s96 = sadd.s32 %s95, 1
      %s97 = scalar_select %p94, %s95, %s96
      %p100 = pneg %p94
      %p101 = scmp.eq.s32.totalorder %s17, 1
      %p102 = por %p100, %p101
      %p103 = scmp.ne.s32.totalorder %s95, %s98
      %p104 = scmp.eq.s32.totalorder %s17, 0
      %p105 = por %p103, %p104
      %p106 = scmp.ne.s32.totalorder %s95, %s98
      %p107 = scmp.eq.s32.totalorder %s22, 1
      %p108 = por %p106, %p107
      %p109 = scmp.ne.s32.totalorder %s98, %s99
      %p110 = scmp.eq.s32.totalorder %s22, 0
      %p111 = por %p109, %p110
      %p112 = scmp.ne.s32.totalorder %s98, %s99
      %p113 = scmp.eq.s32.totalorder %s23, 1
      %p114 = por %p112, %p113
      %p116 = scmp.ne.s32.totalorder %s99, %s115
      %p117 = scmp.eq.s32.totalorder %s23, 0
      %p118 = por %p116, %p117
      %s119 = ssub.s32 %s17, %s24
      %p120 = scmp.eq.s32.totalorder %s119, 0
      %s122 = sadd.s32 %s121, 1
      %s123 = scalar_select %p120, %s121, %s122
      %p126 = pneg %p120
      %p127 = scmp.eq.s32.totalorder %s17, 1
      %p128 = por %p126, %p127
      %p129 = scmp.ne.s32.totalorder %s121, %s124
      %p130 = scmp.eq.s32.totalorder %s17, 0
      %p131 = por %p129, %p130
      %p132 = scmp.ne.s32.totalorder %s121, %s124
      %p133 = scmp.eq.s32.totalorder %s22, 1
      %p134 = por %p132, %p133
      %p135 = scmp.ne.s32.totalorder %s124, %s125
      %p136 = scmp.eq.s32.totalorder %s22, 0
      %p137 = por %p135, %p136
      %p138 = scmp.ne.s32.totalorder %s124, %s125
      %p139 = scmp.eq.s32.totalorder %s23, 1
      %p140 = por %p138, %p139
      %p142 = scmp.ne.s32.totalorder %s125, %s141
      %p143 = scmp.eq.s32.totalorder %s23, 0
      %p144 = por %p142, %p143
      %p145 = scmp.le.s32.totalorder 1, %s17
      %p146 = scmp.lt.s32.totalorder %s17, 3
      %p147 = pnand %p145, %p146
      %p148 = pneg %p147
      // Predicated region
      $region9: #{tpu_custom_call.1} parent=5 // pred_check
        _
      $region10: #{tpu_custom_call.1} parent=5 // pred_check_branch
        %150 = sbr.rel (%p147) target = $region12
      $region11: #{tpu_custom_call.1} parent=5 // pred_region
        %s151 = ssub.s32 %s17, 1
        // Predicated region
        $region13: #{tpu_custom_call.1} parent=11 // pred_check
          %p152 = pneg %p64
        $region14: #{tpu_custom_call.1} parent=11 // pred_check_branch
          %154 = sbr.rel (%p152) target = $region16
        $region15: #{tpu_custom_call.1} parent=11 // pred_region
          _
        $region16: #{tpu_custom_call.1} parent=11 // pred_fallthru
          _
        // Predicated region
        $region17: #{tpu_custom_call.1} parent=11 // pred_check
          %p155 = pneg %p85
        $region18: #{tpu_custom_call.1} parent=11 // pred_check_branch
          %157 = sbr.rel (%p155) target = $region20
        $region19: #{tpu_custom_call.1} parent=11 // pred_region
          _
        $region20: #{tpu_custom_call.1} parent=11 // pred_fallthru
          _
      $region12: #{tpu_custom_call.1} parent=5 // pred_fallthru
        _
      %p158 = scmp.lt.s32.totalorder %s17, 2
      // Predicated region
      $region21: #{tpu_custom_call.1} parent=5 // pred_check
        %p159 = pneg %p158
      $region22: #{tpu_custom_call.1} parent=5 // pred_check_branch
        %161 = sbr.rel (%p159) target = $region24
      $region23: #{tpu_custom_call.1} parent=5 // pred_region
        // Predicated region
        $region25: #{tpu_custom_call.1} parent=23 // pred_check
          %p162 = pneg %p37
        $region26: #{tpu_custom_call.1} parent=23 // pred_check_branch
          %164 = sbr.rel (%p162) target = $region28
        $region27: #{tpu_custom_call.1} parent=23 // pred_region
          %s165 = sand.u32 %s27, 1
          %s166 = scalar_lea.sflag [#allocation4], %s165
          %s167 = sand.u32 %s27, 1
          %s168 = smul.addr %s167, 4
          %s169 = scalar_lea.vmem [#allocation3], %s168
          %171 = vsyncadd %s166, 0
          %s172 = smul.addr %s17, 2
          %s173 = smul.addr %s172, 2
          %s174 = scalar_lea.hbm %s0, %s173
          %s176 = sshll.u32 %s174, 4
          %s177 = int_to_ptr.hbm [resolvable:$true] %s176
          %s178 = sshll.u32 %s169, 4
          %s179 = int_to_ptr.vmem [resolvable:$true] %s178
          %181 = dma.hbm_to_vmem [thread:$0]  %s177, 64, %s179, %s166
        $region28: #{tpu_custom_call.1} parent=23 // pred_fallthru
          _
      $region24: #{tpu_custom_call.1} parent=5 // pred_fallthru
        _
      %p182 = scmp.le.s32.totalorder 1, %s17
      %p183 = scmp.lt.s32.totalorder %s17, 3
      %p184 = pnand %p182, %p183
      %p185 = pneg %p184
      // Predicated region
      $region29: #{tpu_custom_call.1} parent=5 // pred_check
        _
      $region30: #{tpu_custom_call.1} parent=5 // pred_check_branch
        %187 = sbr.rel (%p184) target = $region32
      $region31: #{tpu_custom_call.1} parent=5 // pred_region
        %s188 = ssub.s32 %s17, 1
        %s189 = sand.u32 %s30, 1
        %s190 = scalar_lea.sflag [#allocation4], %s189
        %s191 = sand.u32 %s30, 1
        %s192 = smul.addr %s191, 4
        %s193 = scalar_lea.vmem [#allocation3], %s192
        // Predicated region
        $region33: #{tpu_custom_call.1} parent=31 // pred_check
          %p194 = pneg %p43
        $region34: #{tpu_custom_call.1} parent=31 // pred_check_branch
          %196 = sbr.rel (%p194) target = $region36
        $region35: #{tpu_custom_call.1} parent=31 // pred_region
          %198 = dma.done %s190, 64
        $region36: #{tpu_custom_call.1} parent=31 // pred_fallthru
          _
        %s199 = sand.u32 %s30, 1
        %s200 = scalar_lea.sflag [#allocation4], %s199
        %s201 = sand.u32 %s30, 1
        %s202 = smul.addr %s201, 4
        %s203 = scalar_lea.vmem [#allocation3], %s202
        %p204 = pneg %p43
        %p205 = pneg %p40
        %p206 = pneg %p64
        %p207 = pneg %p61
        %p208 = pneg %p85
        %p209 = pneg %p82
        %p210 = pneg %p111
        %p211 = pneg %p108
        %s212 = sand.u32 %s98, 1
        %s213 = scalar_lea.sflag [#allocation5], %s212
        %s214 = sand.u32 %s98, 1
        %s215 = smul.addr %s214, 4
        %s216 = scalar_lea.vmem [#allocation6], %s215
        %p217 = pneg %p137
        %p218 = pneg %p134
        %p219 = scmp.lt.s32.totalorder %s22, 1
        %s220 = scalar_select %p219, %s22, 1
        %s221 = smul.addr %s220, 4
        %s222 = scalar_lea.vmem %s4, %s221
        %p223 = scmp.lt.s32.totalorder %s22, 1
        %s224 = scalar_select %p223, %s22, 1
        %s225 = smul.addr %s224, 4
        %s226 = scalar_lea.vmem %s4, %s225
        %v230 = vld [vmem:[%s193] sm:$0xf]
        %v231 = vlaneseq
        %v232 = vand.u32 %v231, 127
        %v233 = vadd.s32 %v232, 128
        %vm234 = vcmp.lt.s32.totalorder %v232, 0
        %v235 = vsub.s32 0, %v232
        %v236 = vsel %vm234, %v235, %v232
        %v237 = vshrl.u32 %v236, 4
        %v238 = vand.u32 %v236, 15
        %v239 = vsub.s32 0, %v238
        %v240 = vsel %vm234, %v239, %v238
        %vm241 = vcmp.lt.s32.totalorder %v233, 0
        %v242 = vsub.s32 0, %v233
        %v243 = vsel %vm241, %v242, %v233
        %v244 = vshrl.u32 %v243, 4
        %v245 = vand.u32 %v243, 15
        %v246 = vsub.s32 0, %v245
        %v247 = vsel %vm241, %v246, %v245
        %vm248 = vcmp.ne.s32.totalorder %v240, 0
        %vm249 = vcmp.ne.s32.totalorder %v247, 0
        %vm250 = vcmp.lt.s32.totalorder %v240, 0
        %vm251 = vcmp.lt.s32.totalorder %v247, 0
        %vm252 = vmand %vm250, %vm248
        %vm253 = vmand %vm251, %vm249
        %v254 = vadd.s32 %v240, 16
        %v255 = vadd.s32 %v247, 16
        %v256 = vsel %vm252, %v254, %v240
        %v257 = vsel %vm253, %v255, %v247
        %vm258 = vcmp.eq.s32.totalorder %v256, 15
        %vm259 = vcmp.eq.s32.totalorder %v257, 15
        %261 = vst [vmem:[#allocation1] ss:$4 sm:$0xff] %v230
        %v262 = vld.sshfl [vmem:[#allocation1 + $0x8] sm:$0xff pattern:$0x73625140]
        %264 = vrot.lane.b32.xlu0 %v262, 15
        %v265 = vpop.permute.xlu0 %264
        %266 = vst [vmem:[#allocation1] ss:$4 sm:$0xff] %v230
        %v267 = vld.sshfl [vmem:[#allocation1] sm:$0xff pattern:$0x73625140]
        %v269 = vld.sshfl [vmem:[#allocation1 + $0x8] sm:$0xff pattern:$0x73625140]
        %271 = vrot.lane.b32.xlu0 %v267, 15
        %v272 = vpop.permute.xlu0 %271
        %273 = vrot.lane.b32.xlu0 %v269, 15
        %v274 = vpop.permute.xlu0 %273
        %vm275 = vcmask 121856
        %v276 = vsel %vm275, %v272, %v274
        %vm278 = vcmask 121856
        %v281 = vsel %vm278, %v265, %v272
        %283 = vst [vmem:[#allocation1] ss:$4 sm:$0xff] %v230
        %v284 = vld.sshfl [vmem:[#allocation1] sm:$0xff pattern:$0x73625140]
        %v286 = vld.sshfl [vmem:[#allocation1 + $0x8] sm:$0xff pattern:$0x73625140]
        %288 = vrot.lane.b32.xlu0 %v284, 127
        %v289 = vpop.permute.xlu0 %288
        %290 = vrot.lane.b32.xlu0 %v286, 127
        %v291 = vpop.permute.xlu0 %290
        %vm292 = vcmask 1039360
        %v293 = vsel %vm292, %v289, %v291
        %295 = vst [vmem:[#allocation1] ss:$4 sm:$0xff] %v230
        %v296 = vld.sshfl [vmem:[#allocation1] sm:$0xff pattern:$0x73625140]
        %298 = vrot.lane.b32.xlu0 %v296, 127
        %v299 = vpop.permute.xlu0 %298
        %vm300 = vcmask 1039360
        %v303 = vsel %vm300, %v291, %v299
        %vm305 = vmpackc.low %vm259, %vm258
        %v306 = vsel %vm305, 65537, 0
        %v307 = vperm.slane %v306, 0
        %v308 = vperm.slane %v306, 4
        %v309 = vunpack.c.l.b16 %v307
        %v310 = vunpack.c.h.b16 %v307
        %v311 = vunpack.c.l.b16 0
        %v312 = vunpack.c.h.b16 0
        %vm313 = vcmp.ne.s32.totalorder %v309, %v311
        %vm314 = vcmp.ne.s32.totalorder %v310, %v312
        %vm315 = vmpackc.low %vm314, %vm313
        %v316 = vunpack.c.l.b16 %v308
        %v317 = vunpack.c.h.b16 %v308
        %v318 = vunpack.c.l.b16 0
        %v319 = vunpack.c.h.b16 0
        %vm320 = vcmp.ne.s32.totalorder %v316, %v318
        %vm321 = vcmp.ne.s32.totalorder %v317, %v319
        %vm322 = vmpackc.low %vm321, %vm320
        %v323 = vsel %vm315, %v281, %v293
        %v324 = vsel %vm322, %v276, %v303
        %vm325 = vcmp.eq.s32.totalorder %v256, 0
        %vm326 = vcmp.eq.s32.totalorder %v257, 0
        %327 = vst [vmem:[#allocation1] ss:$4 sm:$0xff] %v230
        %v328 = vld.sshfl [vmem:[#allocation1] sm:$0xff pattern:$0x73625140]
        %v330 = vld.sshfl [vmem:[#allocation1 + $0x8] sm:$0xff pattern:$0x73625140]
        %332 = vrot.lane.b32.xlu0 %v328, 113
        %v333 = vpop.permute.xlu0 %332
        %334 = vrot.lane.b32.xlu0 %v330, 113
        %v335 = vpop.permute.xlu0 %334
        %vm336 = vcmask 924672
        %v337 = vsel %vm336, %v333, %v335
        %339 = vst [vmem:[#allocation1] ss:$4 sm:$0xff] %v230
        %v340 = vld.sshfl [vmem:[#allocation1] sm:$0xff pattern:$0x73625140]
        %342 = vrot.lane.b32.xlu0 %v340, 113
        %v343 = vpop.permute.xlu0 %342
        %vm344 = vcmask 924672
        %v347 = vsel %vm344, %v335, %v343
        %349 = vst [vmem:[#allocation1] ss:$4 sm:$0xff] %v230
        %v350 = vld.sshfl [vmem:[#allocation1 + $0x8] sm:$0xff pattern:$0x73625140]
        %352 = vrot.lane.b32.xlu0 %v350, 1
        %v353 = vpop.permute.xlu0 %352
        %354 = vst [vmem:[#allocation1] ss:$4 sm:$0xff] %v230
        %v355 = vld.sshfl [vmem:[#allocation1] sm:$0xff pattern:$0x73625140]
        %v357 = vld.sshfl [vmem:[#allocation1 + $0x8] sm:$0xff pattern:$0x73625140]
        %359 = vrot.lane.b32.xlu0 %v355, 1
        %v360 = vpop.permute.xlu0 %359
        %361 = vrot.lane.b32.xlu0 %v357, 1
        %v362 = vpop.permute.xlu0 %361
        %vm363 = vcmask 7168
        %v364 = vsel %vm363, %v360, %v362
        %vm366 = vcmask 7168
        %v369 = vsel %vm366, %v353, %v360
        %vm371 = vmpackc.low %vm326, %vm325
        %v372 = vsel %vm371, 65537, 0
        %v373 = vperm.slane %v372, 0
        %v374 = vperm.slane %v372, 4
        %v375 = vunpack.c.l.b16 %v373
        %v376 = vunpack.c.h.b16 %v373
        %v377 = vunpack.c.l.b16 0
        %v378 = vunpack.c.h.b16 0
        %vm379 = vcmp.ne.s32.totalorder %v375, %v377
        %vm380 = vcmp.ne.s32.totalorder %v376, %v378
        %vm381 = vmpackc.low %vm380, %vm379
        %v382 = vunpack.c.l.b16 %v374
        %v383 = vunpack.c.h.b16 %v374
        %v384 = vunpack.c.l.b16 0
        %v385 = vunpack.c.h.b16 0
        %vm386 = vcmp.ne.s32.totalorder %v382, %v384
        %vm387 = vcmp.ne.s32.totalorder %v383, %v385
        %vm388 = vmpackc.low %vm387, %vm386
        %v389 = vsel %vm381, %v337, %v369
        %v390 = vsel %vm388, %v347, %v364
        %392 = vrot.lane.b32.xlu0 %v390, 16
        %v393 = vpop.permute.xlu0 %392
        %395 = vrot.lane.b32.xlu0 %v389, 16
        %v396 = vpop.permute.xlu0 %395
        %vm397 = vcmask 130048
        %v398 = vsel %vm397, %v396, %v393
        %vm399 = vcmask 130048
        %v402 = vsel %vm399, %v393, %v396
        %v404 = vunpack.c.l.b16 %v402
        %v405 = vunpack.c.l.b16 %v398
        %v406 = vpack.c.b16 %v405, %v404
        %408 = vst [vmem:[#allocation2] sm:$0x33] %v406
        %409 = vst [vmem:[#allocation1] ss:$4 sm:$0xff] %v230
        %v410 = vld.sshfl [vmem:[#allocation1 + $0x8] sm:$0xff pattern:$0x73625140]
        %412 = vrot.lane.b32.xlu0 %v410, 16
        %v413 = vpop.permute.xlu0 %412
        %414 = vst [vmem:[#allocation1] ss:$4 sm:$0xff] %v230
        %v415 = vld.sshfl [vmem:[#allocation1] sm:$0xff pattern:$0x73625140]
        %v417 = vld.sshfl [vmem:[#allocation1 + $0x8] sm:$0xff pattern:$0x73625140]
        %419 = vrot.lane.b32.xlu0 %v415, 16
        %v420 = vpop.permute.xlu0 %419
        %421 = vrot.lane.b32.xlu0 %v417, 16
        %v422 = vpop.permute.xlu0 %421
        %v423 = vsel %vm397, %v420, %v422
        %v426 = vsel %vm399, %v413, %v420
        %v428 = vunpack.c.l.b16 %v426
        %v429 = vunpack.c.l.b16 %v423
        %v430 = vpack.c.b16 %v429, %v428
        %v431 = vrot.slane %v430, 6
        %433 = vst [vmem:[#allocation2] sm:$0xcc] %v431
        %435 = vrot.lane.b32.xlu0 %v324, 16
        %v436 = vpop.permute.xlu0 %435
        %438 = vrot.lane.b32.xlu0 %v323, 16
        %v439 = vpop.permute.xlu0 %438
        %v440 = vsel %vm397, %v439, %v436
        %v443 = vsel %vm399, %v436, %v439
        %v445 = vunpack.c.l.b16 %v443
        %v446 = vunpack.c.l.b16 %v440
        %v447 = vpack.c.b16 %v446, %v445
        %449 = vst [vmem:[#allocation2 + $0x8] sm:$0x33] %v447
        %v450 = vunpack.c.l.b16 %v389
        %v451 = vunpack.c.l.b16 %v390
        %v452 = vpack.c.b16 %v451, %v450
        %v453 = vrot.slane %v452, 6
        %455 = vst [vmem:[#allocation2 + $0x8] sm:$0xcc] %v453
        %456 = vst [vmem:[#allocation1] ss:$2 sm:$0xff] %v230
        %v457 = vld.sshfl [vmem:[#allocation1] sm:$0xff pattern:$0x75643120]
        %459 = vst [vmem:[#allocation2 + $0x10] sm:$0x33] %v457
        %v460 = vunpack.c.l.b16 %v323
        %v461 = vunpack.c.l.b16 %v324
        %v462 = vpack.c.b16 %v461, %v460
        %v463 = vrot.slane %v462, 6
        %465 = vst [vmem:[#allocation2 + $0x10] sm:$0xcc] %v463
        %466 = vrot.lane.b32.xlu0 %v389, 112
        %v467 = vpop.permute.xlu0 %466
        %468 = vrot.lane.b32.xlu0 %v390, 112
        %v469 = vpop.permute.xlu0 %468
        %vm470 = vcmask 916480
        %v471 = vsel %vm470, %v467, %v469
        %vm472 = vcmask 916480
        %v475 = vsel %vm472, %v469, %v467
        %v477 = vunpack.c.l.b16 %v471
        %v478 = vunpack.c.l.b16 %v475
        %v479 = vpack.c.b16 %v478, %v477
        %481 = vst [vmem:[#allocation2 + $0x18] sm:$0x33] %v479
        %482 = vst [vmem:[#allocation1] ss:$4 sm:$0xff] %v230
        %v483 = vld.sshfl [vmem:[#allocation1] sm:$0xff pattern:$0x73625140]
        %v485 = vld.sshfl [vmem:[#allocation1 + $0x8] sm:$0xff pattern:$0x73625140]
        %487 = vrot.lane.b32.xlu0 %v483, 112
        %v488 = vpop.permute.xlu0 %487
        %489 = vrot.lane.b32.xlu0 %v485, 112
        %v490 = vpop.permute.xlu0 %489
        %v491 = vsel %vm470, %v488, %v490
        %492 = vst [vmem:[#allocation1] ss:$4 sm:$0xff] %v230
        %v493 = vld.sshfl [vmem:[#allocation1] sm:$0xff pattern:$0x73625140]
        %495 = vrot.lane.b32.xlu0 %v493, 112
        %v496 = vpop.permute.xlu0 %495
        %v499 = vsel %vm472, %v490, %v496
        %v501 = vunpack.c.l.b16 %v491
        %v502 = vunpack.c.l.b16 %v499
        %v503 = vpack.c.b16 %v502, %v501
        %v504 = vrot.slane %v503, 6
        %506 = vst [vmem:[#allocation2 + $0x18] sm:$0xcc] %v504
        %507 = vrot.lane.b32.xlu0 %v323, 112
        %v508 = vpop.permute.xlu0 %507
        %509 = vrot.lane.b32.xlu0 %v324, 112
        %v510 = vpop.permute.xlu0 %509
        %v511 = vsel %vm470, %v508, %v510
        %v514 = vsel %vm472, %v510, %v508
        %v516 = vunpack.c.l.b16 %v511
        %v517 = vunpack.c.l.b16 %v514
        %v518 = vpack.c.b16 %v517, %v516
        %520 = vst [vmem:[#allocation2 + $0x20] sm:$0x33] %v518
        %v521 = vld [vmem:[%s1] sm:$0x3]
        %v522 = vld [vmem:[#allocation2] sm:$0xff]
        %v523 = vld [vmem:[#allocation2 + $0x8] sm:$0xff]
        %v524 = vld [vmem:[#allocation2 + $0x10] sm:$0xff]
        %v525 = vld [vmem:[#allocation2 + $0x18] sm:$0xff]
        %v526 = vld [vmem:[#allocation2 + $0x20] sm:$0x33]
        %v532 = vunpack.c.l.b16 %v522
        %v533 = vunpack.c.h.b16 %v522
        %v534 = vunpack.c.l.b16 %v523
        %v535 = vunpack.c.h.b16 %v523
        %v536 = vunpack.c.l.b16 %v524
        %v537 = vunpack.c.h.b16 %v524
        %v538 = vunpack.c.l.b16 %v525
        %v539 = vunpack.c.h.b16 %v525
        %v540 = vunpack.c.l.b16 %v526
        %v541 = vunpack.c.h.b16 %v526
        %v542 = vpack.c.b16 %v534, %v532
        %v543 = vpack.c.b16 %v535, %v533
        %v544 = vpack.c.b16 %v538, %v536
        %v545 = vpack.c.b16 %v539, %v537
        %v546 = vpack.c.b16 %v540, %v540
        %v547 = vpack.c.b16 %v541, %v541
        %vm552 = vcmask 293888
        %v554 = vsel %vm552, %v521, 0
        %vm556 = vcmask 1041408
        %v558 = vsel %vm556, %v546, 0
        %v561 = vsel %vm556, %v547, 0
        %563 = vmatpush.bf16.msra.mxu0 0
        %564 = vmatpush.bf16.msra.mxu0 0
        %565 = vmatpush.bf16.msra.mxu0 0
        %566 = vmatpush.bf16.msra.mxu0 0
        %567 = vmatpush.bf16.msra.mxu0 0
        %568 = vmatpush.bf16.msra.mxu0 %v558
        %569 = vmatpush.bf16.msra.mxu0 %v544
        %570 = vmatpush.bf16.msra.mxu0 %v542
        %571 = vmatmul.bf16.gmra.mxu0 %v554
        %v572 = vpop.f32.mrf.mxu0
        %v573 = vadd.f32 0.0, %v572
        %v574 = vpop.f32.mrf.mxu0
        %575 = vdwg.mxu0
        %576 = vmatpush.bf16.msra.mxu0 0
        %577 = vmatpush.bf16.msra.mxu0 0
        %578 = vmatpush.bf16.msra.mxu0 0
        %579 = vmatpush.bf16.msra.mxu0 0
        %580 = vmatpush.bf16.msra.mxu0 0
        %581 = vmatpush.bf16.msra.mxu0 %v561
        %582 = vmatpush.bf16.msra.mxu0 %v545
        %583 = vmatpush.bf16.msra.mxu0 %v543
        %584 = vmatmul.bf16.gmra.mxu0 %v554
        %v585 = vpop.f32.mrf.mxu0
        %v586 = vadd.f32 0.0, %v585
        %v587 = vpop.f32.mrf.mxu0
        %588 = vdwg.mxu0
        %vm589 = vcmask 1043456
        %v590 = vsel %vm589, %v573, 0.0
        %v591 = vsel %vm589, %v586, 0.0
        %v592 = vadd.f32 %v590, %v591
        %593 = vadd.xlane.f32.xlu0 %v592
        %v594 = vpop.xlane.xlu0 %593
        %v595 = vmul.f32 %v573, %v573
        %v596 = vmul.f32 %v586, %v586
        %v597 = vsel %vm589, %v595, 0.0
        %v598 = vsel %vm589, %v596, 0.0
        %v599 = vadd.f32 %v597, %v598
        %600 = vadd.xlane.f32.xlu0 %v599
        %v601 = vpop.xlane.xlu0 %600
        %v602 = vsel %vm366, %v594, %v601
        %vm603 = vcmask 11264
        %604 = vst.msk [vmem:[%s226] sm:$0xf] %vm603, %v602
        %v605 = vld [vmem:[%s2] sm:$0xf]
        %607 = vset.pattern.permute.xlu0 0
        %608 = vperm.xlu0 %607, %v605
        %v609 = vpop.permute.xlu0 %608
        %v611 = vadd.f32 %v573, %v609
        %v612 = vadd.f32 %v586, %v609
        %v613 = vpack.c.bf16 %v612, %v611
        %v615 = vrot.slane %v613, 2
        %v618 = vsel %vm556, %v613, %v615
        %620 = vst [vmem:[%s216] sm:$0xf] %v618
        %s621 = sand.u32 %s98, 1
        %s622 = scalar_lea.sflag [#allocation5], %s621
        %s623 = sand.u32 %s98, 1
        %s624 = smul.addr %s623, 4
        %s625 = scalar_lea.vmem [#allocation6], %s624
        %p626 = scmp.lt.s32.totalorder %s22, 1
        %s627 = scalar_select %p626, %s22, 1
        %s628 = smul.addr %s627, 4
        %s629 = scalar_lea.vmem %s4, %s628
        // Predicated region
        $region37: #{tpu_custom_call.1} parent=31 // pred_check
          %p630 = pneg %p108
        $region38: #{tpu_custom_call.1} parent=31 // pred_check_branch
          %632 = sbr.rel (%p630) target = $region40
        $region39: #{tpu_custom_call.1} parent=31 // pred_region
          %634 = vsyncadd %s622, 0
          %s635 = smul.addr %s22, 2
          %s636 = smul.addr %s635, 2
          %s637 = scalar_lea.hbm %s3, %s636
          %s639 = sshll.u32 %s625, 4
          %s640 = int_to_ptr.vmem [resolvable:$true] %s639
          %s641 = sshll.u32 %s637, 4
          %s642 = int_to_ptr.hbm [resolvable:$true] %s641
          %644 = dma.vmem_to_hbm [thread:$0]  %s640, 64, %s642, %s622
        $region40: #{tpu_custom_call.1} parent=31 // pred_fallthru
          _
        // Predicated region
        $region41: #{tpu_custom_call.1} parent=31 // pred_check
          %p645 = pneg %p134
        $region42: #{tpu_custom_call.1} parent=31 // pred_check_branch
          %647 = sbr.rel (%p645) target = $region44
        $region43: #{tpu_custom_call.1} parent=31 // pred_region
          _
        $region44: #{tpu_custom_call.1} parent=31 // pred_fallthru
          _
      $region32: #{tpu_custom_call.1} parent=5 // pred_fallthru
        _
      %p648 = scmp.le.s32.totalorder 2, %s17
      // Predicated region
      $region45: #{tpu_custom_call.1} parent=5 // pred_check
        %p649 = pneg %p648
      $region46: #{tpu_custom_call.1} parent=5 // pred_check_branch
        %651 = sbr.rel (%p649) target = $region48
      $region47: #{tpu_custom_call.1} parent=5 // pred_region
        %s652 = ssub.s32 %s17, 2
        // Predicated region
        $region49: #{tpu_custom_call.1} parent=47 // pred_check
          %p653 = pneg %p114
        $region50: #{tpu_custom_call.1} parent=47 // pred_check_branch
          %655 = sbr.rel (%p653) target = $region52
        $region51: #{tpu_custom_call.1} parent=47 // pred_region
          %s656 = sand.u32 %s99, 1
          %s657 = scalar_lea.sflag [#allocation5], %s656
          %s658 = sand.u32 %s99, 1
          %s659 = smul.addr %s658, 4
          %s660 = scalar_lea.vmem [#allocation6], %s659
          %662 = dma.done %s657, 64
        $region52: #{tpu_custom_call.1} parent=47 // pred_fallthru
          _
        // Predicated region
        $region53: #{tpu_custom_call.1} parent=47 // pred_check
          %p663 = pneg %p140
        $region54: #{tpu_custom_call.1} parent=47 // pred_check_branch
          %665 = sbr.rel (%p663) target = $region56
        $region55: #{tpu_custom_call.1} parent=47 // pred_region
          %p666 = scmp.lt.s32.totalorder %s23, 1
          %s667 = scalar_select %p666, %s23, 1
          %s668 = smul.addr %s667, 4
          %s669 = scalar_lea.vmem %s4, %s668
        $region56: #{tpu_custom_call.1} parent=47 // pred_fallthru
          _
      $region48: #{tpu_custom_call.1} parent=5 // pred_fallthru
        _
    $region6: #{tpu_custom_call.1} parent=1 // loop_footer
      %s21 = sadd.s32 1, %s17
    $region7: #{tpu_custom_call.1} parent=1 // loop_footer_branch
      %16 = sbr.rel target = $region3
    $region8: #{tpu_custom_call.1} parent=1 // loop_exit
      _
    %670 = vsyncpa [#allocation4], 1
    %s671 = scalar_lea.sflag [#allocation4], 1
    %672 = vsyncpa %s671, 1
    %673 = vsyncpa [#allocation5], 1
    %s674 = scalar_lea.sflag [#allocation5], 1
    %675 = vsyncpa %s674, 1

</llo_original>
